<compile_context>
chip_gen: v6e
topology: v6e:2x2x1
jax: 0.10.0
libtpu: 0.0.40
codegen_flags: <defaults>
</compile_context>

<pallas_src>
import jax
import jax.numpy as jnp
from jax.experimental import pallas as pl
from jax.experimental.pallas import tpu as pltpu

_LANES = 128
# Sub-32-bit dtypes pack along sublanes: preferred sublane multiple per itemsize.
_SUBLANE_MULT = {4: 8, 2: 16, 1: 32}


def _identity_copy_kernel(x_ref, o_ref):
    # Pure passthrough: the "hot path" of PrintLayer is identity.
    o_ref[...] = x_ref[...]


def _per_buffer_block_bytes():
    """Per-buffer block size in bytes, generation-dependent.

    2 MiB is safe everywhere (double-buffered in+out = 8 MiB live, under v5e's
    16 MiB scoped-VMEM default and already large enough to hide the ~0.35 us
    per-step overhead at <= 1.4 TB/s).  On v7x-class parts (64 MiB VMEM,
    3.2 TB/s HBM) bump to 4 MiB so DMA time per block dwarfs the step overhead;
    16 MiB live stays well under its 32 MiB scoped default.
    """
    default = 2 << 20
    try:
        info = pltpu.get_tpu_info()
        vmem = getattr(info, "vmem_capacity_bytes", None)
        if vmem is not None and vmem <= (64 << 20):
            return 4 << 20
    except Exception:
        pass
    return default


def _lane_dense_copy(x):
    """HBM-roofline identity copy of x via a lane-dense, row-tiled Pallas kernel."""
    total = int(x.size)
    itemsize = jnp.dtype(x.dtype).itemsize
    sub = _SUBLANE_MULT.get(itemsize, 8)

    flat = x.reshape(-1)

    # Pick the widest lane-dense last dim that divides the element count and
    # still leaves at least one full sublane tile of rows; otherwise pad to a
    # multiple of 128 (full-width unmasked stores) and slice afterwards.
    lanes = None
    for cand in (1024, 512, 256, 128):
        if total % cand == 0 and total // cand >= sub:
            lanes = cand
            break
    if lanes is None:
        lanes = _LANES
        padded = pl.cdiv(total, lanes) * lanes
        if padded != total:
            flat = jnp.pad(flat, (0, padded - total))
        total_p = padded
    else:
        total_p = total

    rows = total_p // lanes
    x2d = flat.reshape(rows, lanes)

    # Row-tiled grid: partial last block is fine (the (8,128) constraint is on
    # the BlockSpec; block_rows is either a sublane multiple or full extent).
    block_bytes = _per_buffer_block_bytes()
    target_rows = max(sub, (block_bytes // (lanes * itemsize)) // sub * sub)
    block_rows = rows if rows <= target_rows else target_rows
    grid = (pl.cdiv(rows, block_rows),)

    out2d = pl.pallas_call(
        _identity_copy_kernel,
        out_shape=jax.ShapeDtypeStruct((rows, lanes), x2d.dtype),
        grid=grid,
        in_specs=[pl.BlockSpec((block_rows, lanes), lambda i: (i, 0))],
        out_specs=pl.BlockSpec((block_rows, lanes), lambda i: (i, 0)),
        compiler_params=pltpu.CompilerParams(
            dimension_semantics=("parallel",),
        ),
        cost_estimate=pl.CostEstimate(
            flops=0,
            transcendentals=0,
            bytes_accessed=2 * rows * lanes * itemsize,
        ),
    )(x2d)

    out = out2d.reshape(-1)
    if total_p != total:
        out = out[:total]
    return out.reshape(x.shape)


def print_layer(x, device_copy=False):
    """Pallas implementation of PrintLayer.forward: print the shape, return x.

    The module is a pure identity, so the default (hot) path returns x with
    zero device work — the dominant optimization.  Set device_copy=True to
    route the tensor through the lane-dense Pallas identity-copy kernel
    (useful as a device-side debugging/profiling anchor).
    """
    # TODO(synk): per-call (not per-trace) printing under jit would need
    # jax.debug.print / pl.debug_print host callbacks.
    print(x.shape)
    if not device_copy or x.size == 0:
        return x
    return _lane_dense_copy(x)


if __name__ == "__main__":
    key = jax.random.PRNGKey(0)
    # Small NCHW input consistent with a CIFAR-10 ResNet feature map.
    shape, dtype = (2, 4, 16, 16), jnp.float32
    x = jax.random.normal(key, shape, dtype=dtype)

    # Hot path (what a model would use): identity, no copy.
    y_fast = print_layer(x)
    assert y_fast is x

    # Exercise the Pallas identity-copy kernel once.
    y = print_layer(x, device_copy=True)
    y = jax.block_until_ready(y)
    assert y.shape == x.shape and y.dtype == x.dtype
    assert bool(jnp.all(y == x))

    # Also exercise the padded (element count not a multiple of 128) path with
    # a sub-32-bit dtype to check the dtype-aware tiling.
    x_odd = jax.random.normal(key, (3, 5, 7), dtype=jnp.bfloat16)
    y_odd = jax.block_until_ready(print_layer(x_odd, device_copy=True))
    assert y_odd.shape == x_odd.shape and y_odd.dtype == x_odd.dtype
    assert bool(jnp.all(y_odd == x_odd))

    print("KERNEL_OK")
</pallas_src>

<mosaic_0001>
module attributes {stable_mosaic.version = 11 : i64} {
  func.func @_identity_copy_kernel(%arg0: i32, %arg1: memref<8x256xf32, #tpu.memory_space<vmem>>, %arg2: memref<8x256xf32, #tpu.memory_space<vmem>>) attributes {dimension_semantics = [#tpu.dimension_semantics<parallel>], iteration_bounds = array<i64: 1>, scalar_prefetch = 0 : i64, scratch_operands = 0 : i64, tpu.core_type = #tpu.core_type<tc>, window_params = [{transform_indices = @transform_0, window_bounds = array<i64: 8, 256>}, {transform_indices = @transform_1, window_bounds = array<i64: 8, 256>}]} {
    %c0 = arith.constant 0 : index
    %c0_0 = arith.constant 0 : index
    %0 = vector.load %arg1[%c0, %c0_0] : memref<8x256xf32, #tpu.memory_space<vmem>>, vector<8x256xf32>
    %c0_1 = arith.constant 0 : index
    %c0_2 = arith.constant 0 : index
    %1 = vector.load %arg2[%c0_1, %c0_2] : memref<8x256xf32, #tpu.memory_space<vmem>>, vector<8x256xf32>
    tpu.vector_store %arg2[%c0_1, %c0_2], %0 {strides = array<i32>} : memref<8x256xf32, #tpu.memory_space<vmem>>, vector<8x256xf32>,
    return
  }
  func.func @transform_0(%arg0: i32) -> (i32, i32) {
    %c0_i32 = arith.constant 0 : i32
    %c0_i32_0 = arith.constant 0 : i32
    return %arg0, %c0_i32 : i32, i32
  }
  func.func @transform_1(%arg0: i32) -> (i32, i32) {
    %c0_i32 = arith.constant 0 : i32
    %c0_i32_0 = arith.constant 0 : i32
    return %arg0, %c0_i32 : i32, i32
  }
}

</mosaic_0001>

<llo_original>
// kernel: tpu_custom_call.1
$region0: #{tpu_custom_call.1}
  #allocation0 [shape = 'u32[]', space=smem, size = 0x4, offset = 0x4, fixed_abs, tag = 'smem constant byte address 0x4 - core index']
  #allocation1 [shape = 'u32[144,128]{1,0:T(1,128)}', space=vmem, size = 0x12000, scoped, tag = 'internal scratch']
  %s0 = inlined_call_operand.hbm [shape: f32[8,256], index: 0, kind: input, shape index: {}]
  %s1 = inlined_call_operand.hbm [shape: f32[8,256], index: 1, kind: output, shape index: {}]
  %s2 = sld [smem:[#allocation0]]
  $region18: #{tpu_custom_call.1} parent=0
    _
  %s4 = ssub.s32 1, %s2
  %s5 = scalar_select 0, %s4, %s2
  $region1: #{tpu_custom_call.1} parent=0
    #allocation2 [shape = 'u8[8192]{0}', space=vmem, size = 0x2000, scoped, tag = 'input window, operand 0, single buffered']
    #allocation3 [shape = 's32[1]{0}', space=sflag, size = 0x4, scoped, tag = 'scoped memory for tpu_custom_call.1']
    #allocation4 [shape = 's32[1]{0}', space=sflag, size = 0x4, scoped, tag = 'scoped memory for tpu_custom_call.1']
    #allocation5 [shape = 'u8[8192]{0}', space=vmem, size = 0x2000, scoped, tag = 'output window, operand 0, single buffered']
    %6 = vsyncpa [#allocation3], 0
    %7 = vsyncpa [#allocation4], 0
    // Predicated region
    $region2: #{tpu_custom_call.1} parent=1 // pred_check
      _
    $region3: #{tpu_custom_call.1} parent=1 // pred_check_branch
      %9 = sbr.rel (0) target = $region5
    $region4: #{tpu_custom_call.1} parent=1 // pred_region
      %s11 = ssub.s32 256, 256
      %12 = vsyncadd [#allocation3], %s11
      %s14 = sshll.u32 [#allocation2], 4
      %s15 = int_to_ptr.vmem [resolvable:$true] %s14
      %17 = dma.hbm_to_vmem [thread:$0]  %s0, 256, %s15, [#allocation3]
    $region5: #{tpu_custom_call.1} parent=1 // pred_fallthru
      _
    // Predicated region
    $region6: #{tpu_custom_call.1} parent=1 // pred_check
      _
    $region7: #{tpu_custom_call.1} parent=1 // pred_check_branch
      %19 = sbr.rel (0) target = $region9
    $region8: #{tpu_custom_call.1} parent=1 // pred_region
      %20 = dma.done [#allocation3], 256
    $region9: #{tpu_custom_call.1} parent=1 // pred_fallthru
      _
    %v21 = vld [vmem:[#allocation2] sm:$0xff]
    %v22 = vld [vmem:[#allocation2 + $0x8] sm:$0xff]
    %23 = vst [vmem:[#allocation5] sm:$0xff] %v21
    %24 = vst [vmem:[#allocation5 + $0x8] sm:$0xff] %v22
    // Predicated region
    $region10: #{tpu_custom_call.1} parent=1 // pred_check
      _
    $region11: #{tpu_custom_call.1} parent=1 // pred_check_branch
      %26 = sbr.rel (0) target = $region13
    $region12: #{tpu_custom_call.1} parent=1 // pred_region
      %s28 = ssub.s32 256, 256
      %29 = vsyncadd [#allocation4], %s28
      %s31 = sshll.u32 [#allocation5], 4
      %s32 = int_to_ptr.vmem [resolvable:$true] %s31
      %34 = dma.vmem_to_hbm [thread:$0]  %s32, 256, %s1, [#allocation4]
    $region13: #{tpu_custom_call.1} parent=1 // pred_fallthru
      _
    // Predicated region
    $region14: #{tpu_custom_call.1} parent=1 // pred_check
      _
    $region15: #{tpu_custom_call.1} parent=1 // pred_check_branch
      %36 = sbr.rel (0) target = $region17
    $region16: #{tpu_custom_call.1} parent=1 // pred_region
      %37 = dma.done [#allocation4], 256
    $region17: #{tpu_custom_call.1} parent=1 // pred_fallthru
      _
    %38 = vsyncpa [#allocation3], 1
    %39 = vsyncpa [#allocation4], 1

</llo_original>
